<compile_context>
chip_gen: v7x
topology: tpu7x:2x2x1
jax: 0.10.0
libtpu: 0.0.40
codegen_flags: <defaults>
</compile_context>

<pallas_src>
import jax
import jax.numpy as jnp
from jax.experimental import pallas as pl
from jax.experimental.pallas import tpu as pltpu

HIDDEN = 128


def _silu(x):
    # SiLU(x) = x * sigmoid(x) = 0.5 * x * (1 + tanh(x/2)); exact, one EUP op.
    return 0.5 * x * (1.0 + jnp.tanh(0.5 * x))


def qnet_kernel(x_ref, w1_ref, b1_ref, w2_ref, b2_ref, w3_ref, b3_ref, o_ref):
    x = x_ref[...]                      # (4, bb)   f32, batch in lanes
    w1 = w1_ref[...]                    # (128, 4)  f32, PyTorch (out, in) layout

    # ---- Layer 1: K=4 contraction as 4 VPU broadcast-FMAs (no MXU push) -------
    h1 = b1_ref[...] + w1[:, 0:1] * x[0:1, :]
    h1 = h1 + w1[:, 1:2] * x[1:2, :]
    h1 = h1 + w1[:, 2:3] * x[2:3, :]
    h1 = h1 + w1[:, 3:4] * x[3:4, :]
    h1 = _silu(h1)                      # (128, bb) f32

    # ---- Layer 2: (128,128) @ (128,bb) on the MXU (bf16 operands on the
    #      training path, f32 accumulate), then SiLU ----------------------------
    h2 = jnp.dot(w2_ref[...], h1.astype(w2_ref.dtype),
                 preferred_element_type=jnp.float32) + b2_ref[...]
    h2 = _silu(h2)                      # (128, bb) f32

    # ---- Layer 3: (1,128) @ (128,bb) on the MXU -> lane-dense (1,bb) output;
    #      scalar bias read from SMEM -------------------------------------------
    q = jnp.dot(w3_ref[...], h2.astype(w3_ref.dtype),
                preferred_element_type=jnp.float32) + b3_ref[0]
    o_ref[...] = q.astype(o_ref.dtype)


def _pick_batch_tile(B, block_b):
    """Per-step batch tile (lane axis).

    Tiled blocks must be a multiple of 128 lanes, so a batch that is not a
    multiple of 128 runs as a single full-array block.  Large batches use the
    largest multiple-of-128 tile <= block_b that divides B, keeping >= 2 grid
    steps once B >= 256 so the 'parallel' axis shards over v7x's two TCs.
    """
    if B % 128 != 0:
        # TODO(synk): masked final tile for large non-128-multiple batches; for
        # now they run as one resident block (fine for actor/inference sizes).
        return B
    tile = min(block_b, B // 2 if B >= 256 else B)
    tile = max(128, (tile // 128) * 128)
    while B % tile != 0:                # largest 128-multiple divisor <= tile
        tile -= 128
    return tile


def qnet_forward(s, a, params, *, block_b=4096, matmul_dtype=jnp.bfloat16):
    """s: (B, 3) f32, a: (B, 1) f32 -> (B, 1) f32.  One pallas_call per batch."""
    w1, b1, w2, b2, w3, b3 = params
    B = s.shape[0]
    bb = _pick_batch_tile(B, block_b)
    assert B % bb == 0

    # Pack + transpose once in XLA: feature-major, batch-in-lanes (4, B).
    xT = jnp.concatenate([s, a], axis=-1).T            # (4, B)

    # MXU operands for layers 2/3 (bf16 on the training path; params could also
    # be stored pre-cast to additionally halve the w2 HBM read).
    w2c = w2.astype(matmul_dtype)
    w3c = w3.astype(matmul_dtype)

    batched = lambda shape: pl.BlockSpec(shape, lambda i: (0, i))
    # TODO(synk): pipeline_mode=pl.Buffered(1) on these grid-invariant weight
    # specs (drops the redundant second pipeline buffer) once single-buffering
    # is verified on the target jax build; negligible at current sizes.
    resident = lambda shape: pl.BlockSpec(shape, lambda i: (0, 0))

    out = pl.pallas_call(
        qnet_kernel,
        out_shape=jax.ShapeDtypeStruct((1, B), jnp.float32),
        grid=(B // bb,),
        in_specs=[
            batched((4, bb)),                                   # x^T tile
            resident((HIDDEN, 4)),                              # w1 (out, in)
            resident((HIDDEN, 1)),                              # b1 column
            resident((HIDDEN, HIDDEN)),                         # w2 (out, in)
            resident((HIDDEN, 1)),                              # b2 column
            resident((1, HIDDEN)),                              # w3 row
            pl.BlockSpec(memory_space=pltpu.MemorySpace.SMEM),  # b3 scalar
        ],
        out_specs=batched((1, bb)),
        compiler_params=pltpu.CompilerParams(
            dimension_semantics=("parallel",)),   # shard batch tiles over v7x TCs
    )(xT, w1, b1, w2c, b2, w3c, b3)

    return out.reshape(B, 1)


def init_params(key):
    """PyTorch-Linear-compatible init, stored in the (out, in) layout the
    feature-major kernel consumes directly; b3 is an SMEM scalar."""
    ks = jax.random.split(key, 6)

    def lin(kw, kb, fan_in, fan_out):
        bound = fan_in ** -0.5
        w = jax.random.uniform(kw, (fan_out, fan_in), jnp.float32, -bound, bound)
        b = jax.random.uniform(kb, (fan_out, 1), jnp.float32, -bound, bound)
        return w, b

    w1, b1 = lin(ks[0], ks[1], 4, HIDDEN)       # (128, 4), (128, 1)
    w2, b2 = lin(ks[2], ks[3], HIDDEN, HIDDEN)  # (128, 128), (128, 1)
    w3, b3 = lin(ks[4], ks[5], HIDDEN, 1)       # (1, 128), (1, 1)
    return (w1, b1, w2, b2, w3, b3.reshape((1,)))


def qnet_reference(s, a, params):
    """Exact-sigmoid, highest-precision reference (CI check per review)."""
    w1, b1, w2, b2, w3, b3 = params
    hi = jax.lax.Precision.HIGHEST
    x = jnp.concatenate([s, a], axis=-1)
    h1 = jax.nn.silu(jnp.dot(x, w1.T, precision=hi) + b1[:, 0])
    h2 = jax.nn.silu(jnp.dot(h1, w2.T, precision=hi) + b2[:, 0])
    return jnp.dot(h2, w3.T, precision=hi) + b3


if __name__ == "__main__":
    key = jax.random.PRNGKey(0)
    k_params, k_s, k_a, k_s2, k_a2 = jax.random.split(key, 5)
    params = init_params(k_params)

    # 1) Small (actor/inference-style) batch, exact f32 MXU path, single grid
    #    step.  Tolerance bounded by MXU f32-pass precision only (SiLU is exact).
    B = 8
    s = jax.random.normal(k_s, (B, 3), jnp.float32)
    a = jax.random.normal(k_a, (B, 1), jnp.float32)
    out = jax.block_until_ready(
        qnet_forward(s, a, params, matmul_dtype=jnp.float32))
    ref = qnet_reference(s, a, params)
    assert out.shape == (B, 1)
    assert jnp.allclose(out, ref, atol=5e-3, rtol=5e-3), "f32 path mismatch"

    # 2) Lane-aligned tiled path (grid=2, 'parallel' axis -> both v7x TCs) with
    #    the default bf16-MXU training configuration; looser tolerance covers
    #    the bf16 cast of the layer-2/3 matmuls.
    B2 = 256
    s2 = jax.random.normal(k_s2, (B2, 3), jnp.float32)
    a2 = jax.random.normal(k_a2, (B2, 1), jnp.float32)
    out2 = jax.block_until_ready(qnet_forward(s2, a2, params))
    ref2 = qnet_reference(s2, a2, params)
    assert out2.shape == (B2, 1)
    assert jnp.allclose(out2, ref2, atol=5e-2, rtol=5e-2), "bf16 tiled path mismatch"

    print("KERNEL_OK")
</pallas_src>

<mosaic_0001>
module attributes {stable_mosaic.version = 11 : i64} {
  func.func @qnet_kernel(%arg0: i32, %arg1: memref<4x8xf32, #tpu.memory_space<vmem>>, %arg2: memref<128x4xf32, #tpu.memory_space<vmem>>, %arg3: memref<128x1xf32, #tpu.memory_space<vmem>>, %arg4: memref<128x128xf32, #tpu.memory_space<vmem>>, %arg5: memref<128x1xf32, #tpu.memory_space<vmem>>, %arg6: memref<1x128xf32, #tpu.memory_space<vmem>>, %arg7: memref<1xf32, #tpu.memory_space<smem>>, %arg8: memref<1x8xf32, #tpu.memory_space<vmem>>) attributes {dimension_semantics = [#tpu.dimension_semantics<parallel>], iteration_bounds = array<i64: 1>, scalar_prefetch = 0 : i64, scratch_operands = 0 : i64, tpu.core_type = #tpu.core_type<tc>, window_params = [{transform_indices = @transform_0, window_bounds = array<i64: 4, 8>}, {pipeline_mode = #tpu.pipeline_mode<synchronous>, transform_indices = @transform_1, window_bounds = array<i64: 128, 4>}, {pipeline_mode = #tpu.pipeline_mode<synchronous>, transform_indices = @transform_2, window_bounds = array<i64: 128, 1>}, {pipeline_mode = #tpu.pipeline_mode<synchronous>, transform_indices = @transform_3, window_bounds = array<i64: 128, 128>}, {pipeline_mode = #tpu.pipeline_mode<synchronous>, transform_indices = @transform_4, window_bounds = array<i64: 128, 1>}, {pipeline_mode = #tpu.pipeline_mode<synchronous>, transform_indices = @transform_5, window_bounds = array<i64: 1, 128>}, {transform_indices = @transform_6, window_bounds = array<i64: 1>}, {transform_indices = @transform_7, window_bounds = array<i64: 1, 8>}]} {
    %c0 = arith.constant 0 : index
    %c0_0 = arith.constant 0 : index
    %0 = vector.load %arg1[%c0, %c0_0] : memref<4x8xf32, #tpu.memory_space<vmem>>, vector<4x8xf32>
    %c0_1 = arith.constant 0 : index
    %c0_2 = arith.constant 0 : index
    %1 = vector.load %arg2[%c0_1, %c0_2] : memref<128x4xf32, #tpu.memory_space<vmem>>, vector<128x4xf32>
    %c0_3 = arith.constant 0 : index
    %c0_4 = arith.constant 0 : index
    %2 = vector.load %arg3[%c0_3, %c0_4] : memref<128x1xf32, #tpu.memory_space<vmem>>, vector<128x1xf32>
    %3 = vector.extract_strided_slice %1 {offsets = [0, 0], sizes = [128, 1], strides = [1, 1]} : vector<128x4xf32> to vector<128x1xf32>
    %4 = vector.extract_strided_slice %0 {offsets = [0, 0], sizes = [1, 8], strides = [1, 1]} : vector<4x8xf32> to vector<1x8xf32>
    %5 = vector.broadcast %3 : vector<128x1xf32> to vector<128x8xf32>
    %6 = vector.broadcast %4 : vector<1x8xf32> to vector<128x8xf32>
    %7 = arith.mulf %5, %6 : vector<128x8xf32>
    %8 = vector.broadcast %2 : vector<128x1xf32> to vector<128x8xf32>
    %9 = arith.addf %8, %7 : vector<128x8xf32>
    %10 = vector.extract_strided_slice %1 {offsets = [0, 1], sizes = [128, 1], strides = [1, 1]} : vector<128x4xf32> to vector<128x1xf32>
    %11 = vector.extract_strided_slice %0 {offsets = [1, 0], sizes = [1, 8], strides = [1, 1]} : vector<4x8xf32> to vector<1x8xf32>
    %12 = vector.broadcast %10 : vector<128x1xf32> to vector<128x8xf32>
    %13 = vector.broadcast %11 : vector<1x8xf32> to vector<128x8xf32>
    %14 = arith.mulf %12, %13 : vector<128x8xf32>
    %15 = arith.addf %9, %14 : vector<128x8xf32>
    %16 = vector.extract_strided_slice %1 {offsets = [0, 2], sizes = [128, 1], strides = [1, 1]} : vector<128x4xf32> to vector<128x1xf32>
    %17 = vector.extract_strided_slice %0 {offsets = [2, 0], sizes = [1, 8], strides = [1, 1]} : vector<4x8xf32> to vector<1x8xf32>
    %18 = vector.broadcast %16 : vector<128x1xf32> to vector<128x8xf32>
    %19 = vector.broadcast %17 : vector<1x8xf32> to vector<128x8xf32>
    %20 = arith.mulf %18, %19 : vector<128x8xf32>
    %21 = arith.addf %15, %20 : vector<128x8xf32>
    %22 = vector.extract_strided_slice %1 {offsets = [0, 3], sizes = [128, 1], strides = [1, 1]} : vector<128x4xf32> to vector<128x1xf32>
    %23 = vector.extract_strided_slice %0 {offsets = [3, 0], sizes = [1, 8], strides = [1, 1]} : vector<4x8xf32> to vector<1x8xf32>
    %24 = vector.broadcast %22 : vector<128x1xf32> to vector<128x8xf32>
    %25 = vector.broadcast %23 : vector<1x8xf32> to vector<128x8xf32>
    %26 = arith.mulf %24, %25 : vector<128x8xf32>
    %27 = arith.addf %21, %26 : vector<128x8xf32>
    %cst = arith.constant 5.000000e-01 : f32
    %28 = vector.broadcast %cst : f32 to vector<128x8xf32>
    %29 = arith.mulf %28, %27 : vector<128x8xf32>
    %cst_5 = arith.constant 5.000000e-01 : f32
    %30 = vector.broadcast %cst_5 : f32 to vector<128x8xf32>
    %31 = arith.mulf %30, %27 : vector<128x8xf32>
    %32 = math.tanh %31 : vector<128x8xf32>
    %cst_6 = arith.constant 1.000000e+00 : f32
    %33 = vector.broadcast %cst_6 : f32 to vector<128x8xf32>
    %34 = arith.addf %33, %32 : vector<128x8xf32>
    %35 = arith.mulf %29, %34 : vector<128x8xf32>
    %c0_7 = arith.constant 0 : index
    %c0_8 = arith.constant 0 : index
    %36 = vector.load %arg4[%c0_7, %c0_8] : memref<128x128xf32, #tpu.memory_space<vmem>>, vector<128x128xf32>
    %cst_9 = arith.constant dense<0.000000e+00> : vector<128x8xf32>
    %37 = tpu.matmul %36, %35, %cst_9 {dimension_numbers = #tpu.dot_dimension_numbers<[1], [0], [0], [1], [0, 0, 1, 1], [], []>} : vector<128x128xf32>, vector<128x8xf32>, vector<128x8xf32> -> vector<128x8xf32>
    %c0_10 = arith.constant 0 : index
    %c0_11 = arith.constant 0 : index
    %38 = vector.load %arg5[%c0_10, %c0_11] : memref<128x1xf32, #tpu.memory_space<vmem>>, vector<128x1xf32>
    %39 = vector.broadcast %38 : vector<128x1xf32> to vector<128x8xf32>
    %40 = arith.addf %37, %39 : vector<128x8xf32>
    %cst_12 = arith.constant 5.000000e-01 : f32
    %41 = vector.broadcast %cst_12 : f32 to vector<128x8xf32>
    %42 = arith.mulf %41, %40 : vector<128x8xf32>
    %cst_13 = arith.constant 5.000000e-01 : f32
    %43 = vector.broadcast %cst_13 : f32 to vector<128x8xf32>
    %44 = arith.mulf %43, %40 : vector<128x8xf32>
    %45 = math.tanh %44 : vector<128x8xf32>
    %cst_14 = arith.constant 1.000000e+00 : f32
    %46 = vector.broadcast %cst_14 : f32 to vector<128x8xf32>
    %47 = arith.addf %46, %45 : vector<128x8xf32>
    %48 = arith.mulf %42, %47 : vector<128x8xf32>
    %c0_15 = arith.constant 0 : index
    %c0_16 = arith.constant 0 : index
    %49 = vector.load %arg6[%c0_15, %c0_16] : memref<1x128xf32, #tpu.memory_space<vmem>>, vector<1x128xf32>
    %cst_17 = arith.constant dense<0.000000e+00> : vector<1x8xf32>
    %50 = tpu.matmul %49, %48, %cst_17 {dimension_numbers = #tpu.dot_dimension_numbers<[1], [0], [0], [1], [0, 0, 1, 1], [], []>} : vector<1x128xf32>, vector<128x8xf32>, vector<1x8xf32> -> vector<1x8xf32>
    %c0_18 = arith.constant 0 : index
    %51 = memref.load %arg7[%c0_18] : memref<1xf32, #tpu.memory_space<smem>>
    %52 = vector.broadcast %51 : f32 to vector<1x8xf32>
    %53 = arith.addf %50, %52 : vector<1x8xf32>
    %c0_19 = arith.constant 0 : index
    %c0_20 = arith.constant 0 : index
    %54 = vector.load %arg8[%c0_19, %c0_20] : memref<1x8xf32, #tpu.memory_space<vmem>>, vector<1x8xf32>
    tpu.vector_store %arg8[%c0_19, %c0_20], %53 {strides = array<i32>} : memref<1x8xf32, #tpu.memory_space<vmem>>, vector<1x8xf32>,
    return
  }
  func.func @transform_0(%arg0: i32) -> (i32, i32) {
    %c0_i32 = arith.constant 0 : i32
    %c0_i32_0 = arith.constant 0 : i32
    return %c0_i32, %arg0 : i32, i32
  }
  func.func @transform_1(%arg0: i32) -> (i32, i32) {
    %c0_i32 = arith.constant 0 : i32
    %c0_i32_0 = arith.constant 0 : i32
    %c0_i32_1 = arith.constant 0 : i32
    return %c0_i32, %c0_i32_0 : i32, i32
  }
  func.func @transform_2(%arg0: i32) -> (i32, i32) {
    %c0_i32 = arith.constant 0 : i32
    %c0_i32_0 = arith.constant 0 : i32
    %c0_i32_1 = arith.constant 0 : i32
    return %c0_i32, %c0_i32_0 : i32, i32
  }
  func.func @transform_3(%arg0: i32) -> (i32, i32) {
    %c0_i32 = arith.constant 0 : i32
    %c0_i32_0 = arith.constant 0 : i32
    %c0_i32_1 = arith.constant 0 : i32
    return %c0_i32, %c0_i32_0 : i32, i32
  }
  func.func @transform_4(%arg0: i32) -> (i32, i32) {
    %c0_i32 = arith.constant 0 : i32
    %c0_i32_0 = arith.constant 0 : i32
    %c0_i32_1 = arith.constant 0 : i32
    return %c0_i32, %c0_i32_0 : i32, i32
  }
  func.func @transform_5(%arg0: i32) -> (i32, i32) {
    %c0_i32 = arith.constant 0 : i32
    %c0_i32_0 = arith.constant 0 : i32
    %c0_i32_1 = arith.constant 0 : i32
    return %c0_i32, %c0_i32_0 : i32, i32
  }
  func.func @transform_6(%arg0: i32) -> i32 {
    %c0_i32 = arith.constant 0 : i32
    %c0_i32_0 = arith.constant 0 : i32
    return %c0_i32 : i32
  }
  func.func @transform_7(%arg0: i32) -> (i32, i32) {
    %c0_i32 = arith.constant 0 : i32
    %c0_i32_0 = arith.constant 0 : i32
    return %c0_i32, %arg0 : i32, i32
  }
}

</mosaic_0001>

<llo_original>
// kernel: tpu_custom_call.1
$region0: #{tpu_custom_call.1}
  #allocation0 [shape = 'u32[]', space=smem, size = 0x4, offset = 0x4, fixed_abs, tag = 'smem constant byte address 0x4 - core index']
  #allocation1 [shape = 'u32[144,128]{1,0:T(1,128)}', space=vmem, size = 0x12000, scoped, tag = 'internal scratch']
  #allocation2 [shape = 'f32[1]{0:T(128)S(6)}', space=smem, size = 0x200, scoped, tag = 'scoped memory for tpu_custom_call.1']
  %s0 = inlined_call_operand.vmem [shape: f32[4,8], index: 0, kind: input, shape index: {}]
  %s1 = inlined_call_operand.vmem [shape: f32[128,4], index: 1, kind: input, shape index: {}]
  %s2 = inlined_call_operand.vmem [shape: f32[128,1], index: 2, kind: input, shape index: {}]
  %s3 = inlined_call_operand.vmem [shape: f32[128,128], index: 3, kind: input, shape index: {}]
  %s4 = inlined_call_operand.vmem [shape: f32[128,1], index: 4, kind: input, shape index: {}]
  %s5 = inlined_call_operand.vmem [shape: f32[1,128], index: 5, kind: input, shape index: {}]
  %s6 = inlined_call_operand.<no memory space> [shape: f32[1], index: 6, kind: input, shape index: {}]
  %s7 = inlined_call_operand.hbm [shape: f32[1,8], index: 7, kind: output, shape index: {}]
  %s8 = sld [smem:[#allocation0]]
  $region38: #{tpu_custom_call.1} parent=0
    _
  %s10 = ssub.s32 1, %s8
  %s11 = scalar_select 0, %s10, %s8
  %12 = sst [smem:[#allocation2]] %s6
  $region1: #{tpu_custom_call.1} parent=0
    #allocation3 [shape = 'u8[512]{0}', space=vmem, size = 0x400, scoped, tag = 'output window, operand 0, single buffered']
    #allocation4 [shape = 's32[1]{0}', space=sflag, size = 0x4, scoped, tag = 'scoped memory for tpu_custom_call.1']
    %13 = vsyncpa [#allocation4], 0
    // Predicated region
    $region2: #{tpu_custom_call.1} parent=1 // pred_check
      _
    $region3: #{tpu_custom_call.1} parent=1 // pred_check_branch
      %15 = sbr.rel (0) target = $region5
    $region4: #{tpu_custom_call.1} parent=1 // pred_region
      _
    $region5: #{tpu_custom_call.1} parent=1 // pred_fallthru
      _
    // Predicated region
    $region6: #{tpu_custom_call.1} parent=1 // pred_check
      _
    $region7: #{tpu_custom_call.1} parent=1 // pred_check_branch
      %17 = sbr.rel (0) target = $region9
    $region8: #{tpu_custom_call.1} parent=1 // pred_region
      _
    $region9: #{tpu_custom_call.1} parent=1 // pred_fallthru
      _
    // Predicated region
    $region10: #{tpu_custom_call.1} parent=1 // pred_check
      _
    $region11: #{tpu_custom_call.1} parent=1 // pred_check_branch
      %19 = sbr.rel (0) target = $region13
    $region12: #{tpu_custom_call.1} parent=1 // pred_region
      _
    $region13: #{tpu_custom_call.1} parent=1 // pred_fallthru
      _
    // Predicated region
    $region14: #{tpu_custom_call.1} parent=1 // pred_check
      _
    $region15: #{tpu_custom_call.1} parent=1 // pred_check_branch
      %21 = sbr.rel (0) target = $region17
    $region16: #{tpu_custom_call.1} parent=1 // pred_region
      _
    $region17: #{tpu_custom_call.1} parent=1 // pred_fallthru
      _
    // Predicated region
    $region18: #{tpu_custom_call.1} parent=1 // pred_check
      _
    $region19: #{tpu_custom_call.1} parent=1 // pred_check_branch
      %23 = sbr.rel (0) target = $region21
    $region20: #{tpu_custom_call.1} parent=1 // pred_region
      _
    $region21: #{tpu_custom_call.1} parent=1 // pred_fallthru
      _
    // Predicated region
    $region22: #{tpu_custom_call.1} parent=1 // pred_check
      _
    $region23: #{tpu_custom_call.1} parent=1 // pred_check_branch
      %25 = sbr.rel (0) target = $region25
    $region24: #{tpu_custom_call.1} parent=1 // pred_region
      _
    $region25: #{tpu_custom_call.1} parent=1 // pred_fallthru
      _
    // Predicated region
    $region26: #{tpu_custom_call.1} parent=1 // pred_check
      _
    $region27: #{tpu_custom_call.1} parent=1 // pred_check_branch
      %27 = sbr.rel (0) target = $region29
    $region28: #{tpu_custom_call.1} parent=1 // pred_region
      _
    $region29: #{tpu_custom_call.1} parent=1 // pred_fallthru
      _
    %v28 = vld [vmem:[%s0] sm:$0xf]
    %v29 = vld [vmem:[%s1] sm:$0xff]
    %v30 = vld [vmem:[%s1 + $0x8] sm:$0xff]
    %v31 = vld [vmem:[%s1 + $0x10] sm:$0xff]
    %v32 = vld [vmem:[%s1 + $0x18] sm:$0xff]
    %v33 = vld [vmem:[%s1 + $0x20] sm:$0xff]
    %v34 = vld [vmem:[%s1 + $0x28] sm:$0xff]
    %v35 = vld [vmem:[%s1 + $0x30] sm:$0xff]
    %v36 = vld [vmem:[%s1 + $0x38] sm:$0xff]
    %v37 = vld [vmem:[%s1 + $0x40] sm:$0xff]
    %v38 = vld [vmem:[%s1 + $0x48] sm:$0xff]
    %v39 = vld [vmem:[%s1 + $0x50] sm:$0xff]
    %v40 = vld [vmem:[%s1 + $0x58] sm:$0xff]
    %v41 = vld [vmem:[%s1 + $0x60] sm:$0xff]
    %v42 = vld [vmem:[%s1 + $0x68] sm:$0xff]
    %v43 = vld [vmem:[%s1 + $0x70] sm:$0xff]
    %v44 = vld [vmem:[%s1 + $0x78] sm:$0xff]
    %v45 = vld [vmem:[%s2] sm:$0xff]
    %v46 = vld [vmem:[%s2 + $0x8] sm:$0xff]
    %v47 = vld [vmem:[%s2 + $0x10] sm:$0xff]
    %v48 = vld [vmem:[%s2 + $0x18] sm:$0xff]
    %v49 = vld [vmem:[%s2 + $0x20] sm:$0xff]
    %v50 = vld [vmem:[%s2 + $0x28] sm:$0xff]
    %v51 = vld [vmem:[%s2 + $0x30] sm:$0xff]
    %v52 = vld [vmem:[%s2 + $0x38] sm:$0xff]
    %v53 = vld [vmem:[%s2 + $0x40] sm:$0xff]
    %v54 = vld [vmem:[%s2 + $0x48] sm:$0xff]
    %v55 = vld [vmem:[%s2 + $0x50] sm:$0xff]
    %v56 = vld [vmem:[%s2 + $0x58] sm:$0xff]
    %v57 = vld [vmem:[%s2 + $0x60] sm:$0xff]
    %v58 = vld [vmem:[%s2 + $0x68] sm:$0xff]
    %v59 = vld [vmem:[%s2 + $0x70] sm:$0xff]
    %v60 = vld [vmem:[%s2 + $0x78] sm:$0xff]
    %62 = vset.pattern.permute.xlu0 0
    %63 = vperm.xlu0 %62, %v29
    %v64 = vpop.permute.xlu0 %63
    %67 = vset.pattern.permute.xlu0 0
    %68 = vperm.xlu0 %67, %v30
    %v69 = vpop.permute.xlu0 %68
    %72 = vset.pattern.permute.xlu0 0
    %73 = vperm.xlu0 %72, %v31
    %v74 = vpop.permute.xlu0 %73
    %77 = vset.pattern.permute.xlu0 0
    %78 = vperm.xlu0 %77, %v32
    %v79 = vpop.permute.xlu0 %78
    %82 = vset.pattern.permute.xlu0 0
    %83 = vperm.xlu0 %82, %v33
    %v84 = vpop.permute.xlu0 %83
    %87 = vset.pattern.permute.xlu0 0
    %88 = vperm.xlu0 %87, %v34
    %v89 = vpop.permute.xlu0 %88
    %92 = vset.pattern.permute.xlu0 0
    %93 = vperm.xlu0 %92, %v35
    %v94 = vpop.permute.xlu0 %93
    %97 = vset.pattern.permute.xlu0 0
    %98 = vperm.xlu0 %97, %v36
    %v99 = vpop.permute.xlu0 %98
    %102 = vset.pattern.permute.xlu0 0
    %103 = vperm.xlu0 %102, %v37
    %v104 = vpop.permute.xlu0 %103
    %107 = vset.pattern.permute.xlu0 0
    %108 = vperm.xlu0 %107, %v38
    %v109 = vpop.permute.xlu0 %108
    %112 = vset.pattern.permute.xlu0 0
    %113 = vperm.xlu0 %112, %v39
    %v114 = vpop.permute.xlu0 %113
    %117 = vset.pattern.permute.xlu0 0
    %118 = vperm.xlu0 %117, %v40
    %v119 = vpop.permute.xlu0 %118
    %122 = vset.pattern.permute.xlu0 0
    %123 = vperm.xlu0 %122, %v41
    %v124 = vpop.permute.xlu0 %123
    %127 = vset.pattern.permute.xlu0 0
    %128 = vperm.xlu0 %127, %v42
    %v129 = vpop.permute.xlu0 %128
    %132 = vset.pattern.permute.xlu0 0
    %133 = vperm.xlu0 %132, %v43
    %v134 = vpop.permute.xlu0 %133
    %137 = vset.pattern.permute.xlu0 0
    %138 = vperm.xlu0 %137, %v44
    %v139 = vpop.permute.xlu0 %138
    %v141 = vlaneseq
    %v142 = vshrl.u32 %v141, 7
    %v143 = vsub.s32 0, %v142
    %v144 = vrot.slane %v28, %v143
    %v145 = vmul.f32 %v64, %v144
    %v146 = vmul.f32 %v69, %v144
    %v147 = vmul.f32 %v74, %v144
    %v148 = vmul.f32 %v79, %v144
    %v149 = vmul.f32 %v84, %v144
    %v150 = vmul.f32 %v89, %v144
    %v151 = vmul.f32 %v94, %v144
    %v152 = vmul.f32 %v99, %v144
    %v153 = vmul.f32 %v104, %v144
    %v154 = vmul.f32 %v109, %v144
    %v155 = vmul.f32 %v114, %v144
    %v156 = vmul.f32 %v119, %v144
    %v157 = vmul.f32 %v124, %v144
    %v158 = vmul.f32 %v129, %v144
    %v159 = vmul.f32 %v134, %v144
    %v160 = vmul.f32 %v139, %v144
    %162 = vset.pattern.permute.xlu0 0
    %163 = vperm.xlu0 %162, %v45
    %v164 = vpop.permute.xlu0 %163
    %167 = vset.pattern.permute.xlu0 0
    %168 = vperm.xlu0 %167, %v46
    %v169 = vpop.permute.xlu0 %168
    %172 = vset.pattern.permute.xlu0 0
    %173 = vperm.xlu0 %172, %v47
    %v174 = vpop.permute.xlu0 %173
    %177 = vset.pattern.permute.xlu0 0
    %178 = vperm.xlu0 %177, %v48
    %v179 = vpop.permute.xlu0 %178
    %182 = vset.pattern.permute.xlu0 0
    %183 = vperm.xlu0 %182, %v49
    %v184 = vpop.permute.xlu0 %183
    %187 = vset.pattern.permute.xlu0 0
    %188 = vperm.xlu0 %187, %v50
    %v189 = vpop.permute.xlu0 %188
    %192 = vset.pattern.permute.xlu0 0
    %193 = vperm.xlu0 %192, %v51
    %v194 = vpop.permute.xlu0 %193
    %197 = vset.pattern.permute.xlu0 0
    %198 = vperm.xlu0 %197, %v52
    %v199 = vpop.permute.xlu0 %198
    %202 = vset.pattern.permute.xlu0 0
    %203 = vperm.xlu0 %202, %v53
    %v204 = vpop.permute.xlu0 %203
    %207 = vset.pattern.permute.xlu0 0
    %208 = vperm.xlu0 %207, %v54
    %v209 = vpop.permute.xlu0 %208
    %212 = vset.pattern.permute.xlu0 0
    %213 = vperm.xlu0 %212, %v55
    %v214 = vpop.permute.xlu0 %213
    %217 = vset.pattern.permute.xlu0 0
    %218 = vperm.xlu0 %217, %v56
    %v219 = vpop.permute.xlu0 %218
    %222 = vset.pattern.permute.xlu0 0
    %223 = vperm.xlu0 %222, %v57
    %v224 = vpop.permute.xlu0 %223
    %227 = vset.pattern.permute.xlu0 0
    %228 = vperm.xlu0 %227, %v58
    %v229 = vpop.permute.xlu0 %228
    %232 = vset.pattern.permute.xlu0 0
    %233 = vperm.xlu0 %232, %v59
    %v234 = vpop.permute.xlu0 %233
    %237 = vset.pattern.permute.xlu0 0
    %238 = vperm.xlu0 %237, %v60
    %v239 = vpop.permute.xlu0 %238
    %v241 = vadd.f32 %v164, %v145
    %v242 = vadd.f32 %v169, %v146
    %v243 = vadd.f32 %v174, %v147
    %v244 = vadd.f32 %v179, %v148
    %v245 = vadd.f32 %v184, %v149
    %v246 = vadd.f32 %v189, %v150
    %v247 = vadd.f32 %v194, %v151
    %v248 = vadd.f32 %v199, %v152
    %v249 = vadd.f32 %v204, %v153
    %v250 = vadd.f32 %v209, %v154
    %v251 = vadd.f32 %v214, %v155
    %v252 = vadd.f32 %v219, %v156
    %v253 = vadd.f32 %v224, %v157
    %v254 = vadd.f32 %v229, %v158
    %v255 = vadd.f32 %v234, %v159
    %v256 = vadd.f32 %v239, %v160
    %257 = vset.pattern.permute.xlu0 1
    %258 = vperm.xlu0 %257, %v29
    %v259 = vpop.permute.xlu0 %258
    %261 = vset.pattern.permute.xlu0 1
    %262 = vperm.xlu0 %261, %v30
    %v263 = vpop.permute.xlu0 %262
    %265 = vset.pattern.permute.xlu0 1
    %266 = vperm.xlu0 %265, %v31
    %v267 = vpop.permute.xlu0 %266
    %269 = vset.pattern.permute.xlu0 1
    %270 = vperm.xlu0 %269, %v32
    %v271 = vpop.permute.xlu0 %270
    %273 = vset.pattern.permute.xlu0 1
    %274 = vperm.xlu0 %273, %v33
    %v275 = vpop.permute.xlu0 %274
    %277 = vset.pattern.permute.xlu0 1
    %278 = vperm.xlu0 %277, %v34
    %v279 = vpop.permute.xlu0 %278
    %281 = vset.pattern.permute.xlu0 1
    %282 = vperm.xlu0 %281, %v35
    %v283 = vpop.permute.xlu0 %282
    %285 = vset.pattern.permute.xlu0 1
    %286 = vperm.xlu0 %285, %v36
    %v287 = vpop.permute.xlu0 %286
    %289 = vset.pattern.permute.xlu0 1
    %290 = vperm.xlu0 %289, %v37
    %v291 = vpop.permute.xlu0 %290
    %293 = vset.pattern.permute.xlu0 1
    %294 = vperm.xlu0 %293, %v38
    %v295 = vpop.permute.xlu0 %294
    %297 = vset.pattern.permute.xlu0 1
    %298 = vperm.xlu0 %297, %v39
    %v299 = vpop.permute.xlu0 %298
    %301 = vset.pattern.permute.xlu0 1
    %302 = vperm.xlu0 %301, %v40
    %v303 = vpop.permute.xlu0 %302
    %305 = vset.pattern.permute.xlu0 1
    %306 = vperm.xlu0 %305, %v41
    %v307 = vpop.permute.xlu0 %306
    %309 = vset.pattern.permute.xlu0 1
    %310 = vperm.xlu0 %309, %v42
    %v311 = vpop.permute.xlu0 %310
    %313 = vset.pattern.permute.xlu0 1
    %314 = vperm.xlu0 %313, %v43
    %v315 = vpop.permute.xlu0 %314
    %317 = vset.pattern.permute.xlu0 1
    %318 = vperm.xlu0 %317, %v44
    %v319 = vpop.permute.xlu0 %318
    %v321 = vlaneseq
    %v322 = vshrl.u32 %v321, 7
    %v323 = vsub.s32 1, %v322
    %v324 = vrot.slane %v28, %v323
    %v325 = vmul.f32 %v259, %v324
    %v326 = vmul.f32 %v263, %v324
    %v327 = vmul.f32 %v267, %v324
    %v328 = vmul.f32 %v271, %v324
    %v329 = vmul.f32 %v275, %v324
    %v330 = vmul.f32 %v279, %v324
    %v331 = vmul.f32 %v283, %v324
    %v332 = vmul.f32 %v287, %v324
    %v333 = vmul.f32 %v291, %v324
    %v334 = vmul.f32 %v295, %v324
    %v335 = vmul.f32 %v299, %v324
    %v336 = vmul.f32 %v303, %v324
    %v337 = vmul.f32 %v307, %v324
    %v338 = vmul.f32 %v311, %v324
    %v339 = vmul.f32 %v315, %v324
    %v340 = vmul.f32 %v319, %v324
    %v341 = vadd.f32 %v241, %v325
    %v342 = vadd.f32 %v242, %v326
    %v343 = vadd.f32 %v243, %v327
    %v344 = vadd.f32 %v244, %v328
    %v345 = vadd.f32 %v245, %v329
    %v346 = vadd.f32 %v246, %v330
    %v347 = vadd.f32 %v247, %v331
    %v348 = vadd.f32 %v248, %v332
    %v349 = vadd.f32 %v249, %v333
    %v350 = vadd.f32 %v250, %v334
    %v351 = vadd.f32 %v251, %v335
    %v352 = vadd.f32 %v252, %v336
    %v353 = vadd.f32 %v253, %v337
    %v354 = vadd.f32 %v254, %v338
    %v355 = vadd.f32 %v255, %v339
    %v356 = vadd.f32 %v256, %v340
    %357 = vset.pattern.permute.xlu0 2
    %358 = vperm.xlu0 %357, %v29
    %v359 = vpop.permute.xlu0 %358
    %361 = vset.pattern.permute.xlu0 2
    %362 = vperm.xlu0 %361, %v30
    %v363 = vpop.permute.xlu0 %362
    %365 = vset.pattern.permute.xlu0 2
    %366 = vperm.xlu0 %365, %v31
    %v367 = vpop.permute.xlu0 %366
    %369 = vset.pattern.permute.xlu0 2
    %370 = vperm.xlu0 %369, %v32
    %v371 = vpop.permute.xlu0 %370
    %373 = vset.pattern.permute.xlu0 2
    %374 = vperm.xlu0 %373, %v33
    %v375 = vpop.permute.xlu0 %374
    %377 = vset.pattern.permute.xlu0 2
    %378 = vperm.xlu0 %377, %v34
    %v379 = vpop.permute.xlu0 %378
    %381 = vset.pattern.permute.xlu0 2
    %382 = vperm.xlu0 %381, %v35
    %v383 = vpop.permute.xlu0 %382
    %385 = vset.pattern.permute.xlu0 2
    %386 = vperm.xlu0 %385, %v36
    %v387 = vpop.permute.xlu0 %386
    %389 = vset.pattern.permute.xlu0 2
    %390 = vperm.xlu0 %389, %v37
    %v391 = vpop.permute.xlu0 %390
    %393 = vset.pattern.permute.xlu0 2
    %394 = vperm.xlu0 %393, %v38
    %v395 = vpop.permute.xlu0 %394
    %397 = vset.pattern.permute.xlu0 2
    %398 = vperm.xlu0 %397, %v39
    %v399 = vpop.permute.xlu0 %398
    %401 = vset.pattern.permute.xlu0 2
    %402 = vperm.xlu0 %401, %v40
    %v403 = vpop.permute.xlu0 %402
    %405 = vset.pattern.permute.xlu0 2
    %406 = vperm.xlu0 %405, %v41
    %v407 = vpop.permute.xlu0 %406
    %409 = vset.pattern.permute.xlu0 2
    %410 = vperm.xlu0 %409, %v42
    %v411 = vpop.permute.xlu0 %410
    %413 = vset.pattern.permute.xlu0 2
    %414 = vperm.xlu0 %413, %v43
    %v415 = vpop.permute.xlu0 %414
    %417 = vset.pattern.permute.xlu0 2
    %418 = vperm.xlu0 %417, %v44
    %v419 = vpop.permute.xlu0 %418
    %v421 = vlaneseq
    %v422 = vshrl.u32 %v421, 7
    %v423 = vsub.s32 2, %v422
    %v424 = vrot.slane %v28, %v423
    %v425 = vmul.f32 %v359, %v424
    %v426 = vmul.f32 %v363, %v424
    %v427 = vmul.f32 %v367, %v424
    %v428 = vmul.f32 %v371, %v424
    %v429 = vmul.f32 %v375, %v424
    %v430 = vmul.f32 %v379, %v424
    %v431 = vmul.f32 %v383, %v424
    %v432 = vmul.f32 %v387, %v424
    %v433 = vmul.f32 %v391, %v424
    %v434 = vmul.f32 %v395, %v424
    %v435 = vmul.f32 %v399, %v424
    %v436 = vmul.f32 %v403, %v424
    %v437 = vmul.f32 %v407, %v424
    %v438 = vmul.f32 %v411, %v424
    %v439 = vmul.f32 %v415, %v424
    %v440 = vmul.f32 %v419, %v424
    %v441 = vadd.f32 %v341, %v425
    %v442 = vadd.f32 %v342, %v426
    %v443 = vadd.f32 %v343, %v427
    %v444 = vadd.f32 %v344, %v428
    %v445 = vadd.f32 %v345, %v429
    %v446 = vadd.f32 %v346, %v430
    %v447 = vadd.f32 %v347, %v431
    %v448 = vadd.f32 %v348, %v432
    %v449 = vadd.f32 %v349, %v433
    %v450 = vadd.f32 %v350, %v434
    %v451 = vadd.f32 %v351, %v435
    %v452 = vadd.f32 %v352, %v436
    %v453 = vadd.f32 %v353, %v437
    %v454 = vadd.f32 %v354, %v438
    %v455 = vadd.f32 %v355, %v439
    %v456 = vadd.f32 %v356, %v440
    %457 = vset.pattern.permute.xlu0 3
    %458 = vperm.xlu0 %457, %v29
    %v459 = vpop.permute.xlu0 %458
    %461 = vset.pattern.permute.xlu0 3
    %462 = vperm.xlu0 %461, %v30
    %v463 = vpop.permute.xlu0 %462
    %465 = vset.pattern.permute.xlu0 3
    %466 = vperm.xlu0 %465, %v31
    %v467 = vpop.permute.xlu0 %466
    %469 = vset.pattern.permute.xlu0 3
    %470 = vperm.xlu0 %469, %v32
    %v471 = vpop.permute.xlu0 %470
    %473 = vset.pattern.permute.xlu0 3
    %474 = vperm.xlu0 %473, %v33
    %v475 = vpop.permute.xlu0 %474
    %477 = vset.pattern.permute.xlu0 3
    %478 = vperm.xlu0 %477, %v34
    %v479 = vpop.permute.xlu0 %478
    %481 = vset.pattern.permute.xlu0 3
    %482 = vperm.xlu0 %481, %v35
    %v483 = vpop.permute.xlu0 %482
    %485 = vset.pattern.permute.xlu0 3
    %486 = vperm.xlu0 %485, %v36
    %v487 = vpop.permute.xlu0 %486
    %489 = vset.pattern.permute.xlu0 3
    %490 = vperm.xlu0 %489, %v37
    %v491 = vpop.permute.xlu0 %490
    %493 = vset.pattern.permute.xlu0 3
    %494 = vperm.xlu0 %493, %v38
    %v495 = vpop.permute.xlu0 %494
    %497 = vset.pattern.permute.xlu0 3
    %498 = vperm.xlu0 %497, %v39
    %v499 = vpop.permute.xlu0 %498
    %501 = vset.pattern.permute.xlu0 3
    %502 = vperm.xlu0 %501, %v40
    %v503 = vpop.permute.xlu0 %502
    %505 = vset.pattern.permute.xlu0 3
    %506 = vperm.xlu0 %505, %v41
    %v507 = vpop.permute.xlu0 %506
    %509 = vset.pattern.permute.xlu0 3
    %510 = vperm.xlu0 %509, %v42
    %v511 = vpop.permute.xlu0 %510
    %513 = vset.pattern.permute.xlu0 3
    %514 = vperm.xlu0 %513, %v43
    %v515 = vpop.permute.xlu0 %514
    %517 = vset.pattern.permute.xlu0 3
    %518 = vperm.xlu0 %517, %v44
    %v519 = vpop.permute.xlu0 %518
    %v521 = vlaneseq
    %v522 = vshrl.u32 %v521, 7
    %v523 = vsub.s32 3, %v522
    %v524 = vrot.slane %v28, %v523
    %v525 = vmul.f32 %v459, %v524
    %v526 = vmul.f32 %v463, %v524
    %v527 = vmul.f32 %v467, %v524
    %v528 = vmul.f32 %v471, %v524
    %v529 = vmul.f32 %v475, %v524
    %v530 = vmul.f32 %v479, %v524
    %v531 = vmul.f32 %v483, %v524
    %v532 = vmul.f32 %v487, %v524
    %v533 = vmul.f32 %v491, %v524
    %v534 = vmul.f32 %v495, %v524
    %v535 = vmul.f32 %v499, %v524
    %v536 = vmul.f32 %v503, %v524
    %v537 = vmul.f32 %v507, %v524
    %v538 = vmul.f32 %v511, %v524
    %v539 = vmul.f32 %v515, %v524
    %v540 = vmul.f32 %v519, %v524
    %v541 = vadd.f32 %v441, %v525
    %v542 = vadd.f32 %v442, %v526
    %v543 = vadd.f32 %v443, %v527
    %v544 = vadd.f32 %v444, %v528
    %v545 = vadd.f32 %v445, %v529
    %v546 = vadd.f32 %v446, %v530
    %v547 = vadd.f32 %v447, %v531
    %v548 = vadd.f32 %v448, %v532
    %v549 = vadd.f32 %v449, %v533
    %v550 = vadd.f32 %v450, %v534
    %v551 = vadd.f32 %v451, %v535
    %v552 = vadd.f32 %v452, %v536
    %v553 = vadd.f32 %v453, %v537
    %v554 = vadd.f32 %v454, %v538
    %v555 = vadd.f32 %v455, %v539
    %v556 = vadd.f32 %v456, %v540
    %v557 = vmul.f32 %v541, 0.5
    %v558 = vmul.f32 %v542, 0.5
    %v559 = vmul.f32 %v543, 0.5
    %v560 = vmul.f32 %v544, 0.5
    %v561 = vmul.f32 %v545, 0.5
    %v562 = vmul.f32 %v546, 0.5
    %v563 = vmul.f32 %v547, 0.5
    %v564 = vmul.f32 %v548, 0.5
    %v565 = vmul.f32 %v549, 0.5
    %v566 = vmul.f32 %v550, 0.5
    %v567 = vmul.f32 %v551, 0.5
    %v568 = vmul.f32 %v552, 0.5
    %v569 = vmul.f32 %v553, 0.5
    %v570 = vmul.f32 %v554, 0.5
    %v571 = vmul.f32 %v555, 0.5
    %v572 = vmul.f32 %v556, 0.5
    %v573 = vtanh.pop %v557
    %v574 = vtanh.pop %v558
    %v575 = vtanh.pop %v559
    %v576 = vtanh.pop %v560
    %v577 = vtanh.pop %v561
    %v578 = vtanh.pop %v562
    %v579 = vtanh.pop %v563
    %v580 = vtanh.pop %v564
    %v581 = vtanh.pop %v565
    %v582 = vtanh.pop %v566
    %v583 = vtanh.pop %v567
    %v584 = vtanh.pop %v568
    %v585 = vtanh.pop %v569
    %v586 = vtanh.pop %v570
    %v587 = vtanh.pop %v571
    %v588 = vtanh.pop %v572
    %v589 = vadd.f32 %v573, 1.0
    %v590 = vadd.f32 %v574, 1.0
    %v591 = vadd.f32 %v575, 1.0
    %v592 = vadd.f32 %v576, 1.0
    %v593 = vadd.f32 %v577, 1.0
    %v594 = vadd.f32 %v578, 1.0
    %v595 = vadd.f32 %v579, 1.0
    %v596 = vadd.f32 %v580, 1.0
    %v597 = vadd.f32 %v581, 1.0
    %v598 = vadd.f32 %v582, 1.0
    %v599 = vadd.f32 %v583, 1.0
    %v600 = vadd.f32 %v584, 1.0
    %v601 = vadd.f32 %v585, 1.0
    %v602 = vadd.f32 %v586, 1.0
    %v603 = vadd.f32 %v587, 1.0
    %v604 = vadd.f32 %v588, 1.0
    %v605 = vmul.f32 %v557, %v589
    %v606 = vmul.f32 %v558, %v590
    %v607 = vmul.f32 %v559, %v591
    %v608 = vmul.f32 %v560, %v592
    %v609 = vmul.f32 %v561, %v593
    %v610 = vmul.f32 %v562, %v594
    %v611 = vmul.f32 %v563, %v595
    %v612 = vmul.f32 %v564, %v596
    %v613 = vmul.f32 %v565, %v597
    %v614 = vmul.f32 %v566, %v598
    %v615 = vmul.f32 %v567, %v599
    %v616 = vmul.f32 %v568, %v600
    %v617 = vmul.f32 %v569, %v601
    %v618 = vmul.f32 %v570, %v602
    %v619 = vmul.f32 %v571, %v603
    %v620 = vmul.f32 %v572, %v604
    %v621 = vld [vmem:[%s3] sm:$0xff]
    %v622 = vld [vmem:[%s3 + $0x8] sm:$0xff]
    %v623 = vld [vmem:[%s3 + $0x10] sm:$0xff]
    %v624 = vld [vmem:[%s3 + $0x18] sm:$0xff]
    %v625 = vld [vmem:[%s3 + $0x20] sm:$0xff]
    %v626 = vld [vmem:[%s3 + $0x28] sm:$0xff]
    %v627 = vld [vmem:[%s3 + $0x30] sm:$0xff]
    %v628 = vld [vmem:[%s3 + $0x38] sm:$0xff]
    %v629 = vld [vmem:[%s3 + $0x40] sm:$0xff]
    %v630 = vld [vmem:[%s3 + $0x48] sm:$0xff]
    %v631 = vld [vmem:[%s3 + $0x50] sm:$0xff]
    %v632 = vld [vmem:[%s3 + $0x58] sm:$0xff]
    %v633 = vld [vmem:[%s3 + $0x60] sm:$0xff]
    %v634 = vld [vmem:[%s3 + $0x68] sm:$0xff]
    %v635 = vld [vmem:[%s3 + $0x70] sm:$0xff]
    %v636 = vld [vmem:[%s3 + $0x78] sm:$0xff]
    %v637 = vld [vmem:[%s4] sm:$0xff]
    %v638 = vld [vmem:[%s4 + $0x8] sm:$0xff]
    %v639 = vld [vmem:[%s4 + $0x10] sm:$0xff]
    %v640 = vld [vmem:[%s4 + $0x18] sm:$0xff]
    %v641 = vld [vmem:[%s4 + $0x20] sm:$0xff]
    %v642 = vld [vmem:[%s4 + $0x28] sm:$0xff]
    %v643 = vld [vmem:[%s4 + $0x30] sm:$0xff]
    %v644 = vld [vmem:[%s4 + $0x38] sm:$0xff]
    %v645 = vld [vmem:[%s4 + $0x40] sm:$0xff]
    %v646 = vld [vmem:[%s4 + $0x48] sm:$0xff]
    %v647 = vld [vmem:[%s4 + $0x50] sm:$0xff]
    %v648 = vld [vmem:[%s4 + $0x58] sm:$0xff]
    %v649 = vld [vmem:[%s4 + $0x60] sm:$0xff]
    %v650 = vld [vmem:[%s4 + $0x68] sm:$0xff]
    %v651 = vld [vmem:[%s4 + $0x70] sm:$0xff]
    %v652 = vld [vmem:[%s4 + $0x78] sm:$0xff]
    %654 = vset.pattern.permute.xlu0 0
    %655 = vperm.xlu0 %654, %v637
    %v656 = vpop.permute.xlu0 %655
    %659 = vset.pattern.permute.xlu0 0
    %660 = vperm.xlu0 %659, %v638
    %v661 = vpop.permute.xlu0 %660
    %664 = vset.pattern.permute.xlu0 0
    %665 = vperm.xlu0 %664, %v639
    %v666 = vpop.permute.xlu0 %665
    %669 = vset.pattern.permute.xlu0 0
    %670 = vperm.xlu0 %669, %v640
    %v671 = vpop.permute.xlu0 %670
    %674 = vset.pattern.permute.xlu0 0
    %675 = vperm.xlu0 %674, %v641
    %v676 = vpop.permute.xlu0 %675
    %679 = vset.pattern.permute.xlu0 0
    %680 = vperm.xlu0 %679, %v642
    %v681 = vpop.permute.xlu0 %680
    %684 = vset.pattern.permute.xlu0 0
    %685 = vperm.xlu0 %684, %v643
    %v686 = vpop.permute.xlu0 %685
    %689 = vset.pattern.permute.xlu0 0
    %690 = vperm.xlu0 %689, %v644
    %v691 = vpop.permute.xlu0 %690
    %694 = vset.pattern.permute.xlu0 0
    %695 = vperm.xlu0 %694, %v645
    %v696 = vpop.permute.xlu0 %695
    %699 = vset.pattern.permute.xlu0 0
    %700 = vperm.xlu0 %699, %v646
    %v701 = vpop.permute.xlu0 %700
    %704 = vset.pattern.permute.xlu0 0
    %705 = vperm.xlu0 %704, %v647
    %v706 = vpop.permute.xlu0 %705
    %709 = vset.pattern.permute.xlu0 0
    %710 = vperm.xlu0 %709, %v648
    %v711 = vpop.permute.xlu0 %710
    %714 = vset.pattern.permute.xlu0 0
    %715 = vperm.xlu0 %714, %v649
    %v716 = vpop.permute.xlu0 %715
    %719 = vset.pattern.permute.xlu0 0
    %720 = vperm.xlu0 %719, %v650
    %v721 = vpop.permute.xlu0 %720
    %724 = vset.pattern.permute.xlu0 0
    %725 = vperm.xlu0 %724, %v651
    %v726 = vpop.permute.xlu0 %725
    %729 = vset.pattern.permute.xlu0 0
    %730 = vperm.xlu0 %729, %v652
    %v731 = vpop.permute.xlu0 %730
    %733 = vmatprep.subr.mxu0 0.0
    %734 = vmatpush1.msra.mxu0 %v605
    %735 = vmatprep.subr.mxu0 0.0
    %736 = vmatpush1.msra.mxu0 %v606
    %737 = vmatprep.subr.mxu0 0.0
    %738 = vmatpush1.msra.mxu0 %v607
    %739 = vmatprep.subr.mxu0 0.0
    %740 = vmatpush1.msra.mxu0 %v608
    %741 = vmatprep.subr.mxu0 0.0
    %742 = vmatpush1.msra.mxu0 %v609
    %743 = vmatprep.subr.mxu0 0.0
    %744 = vmatpush1.msra.mxu0 %v610
    %745 = vmatprep.subr.mxu0 0.0
    %746 = vmatpush1.msra.mxu0 %v611
    %747 = vmatprep.subr.mxu0 0.0
    %748 = vmatpush1.msra.mxu0 %v612
    %749 = vmatprep.subr.mxu0 0.0
    %750 = vmatpush1.msra.mxu0 %v613
    %751 = vmatprep.subr.mxu0 0.0
    %752 = vmatpush1.msra.mxu0 %v614
    %753 = vmatprep.subr.mxu0 0.0
    %754 = vmatpush1.msra.mxu0 %v615
    %755 = vmatprep.subr.mxu0 0.0
    %756 = vmatpush1.msra.mxu0 %v616
    %757 = vmatprep.subr.mxu0 0.0
    %758 = vmatpush1.msra.mxu0 %v617
    %759 = vmatprep.subr.mxu0 0.0
    %760 = vmatpush1.msra.mxu0 %v618
    %761 = vmatprep.subr.mxu0 0.0
    %762 = vmatpush1.msra.mxu0 %v619
    %763 = vmatprep.subr.mxu0 0.0
    %764 = vmatpush1.msra.mxu0 %v620
    %765 = vmatprep.subr.mxu0 0.0
    %766 = vmatpush1.msra.mxu0 0.0
    %767 = vmatprep.subr.mxu0 0.0
    %768 = vmatpush1.msra.mxu0 0.0
    %769 = vmatprep.subr.mxu0 0.0
    %770 = vmatpush1.msra.mxu0 0.0
    %771 = vmatprep.subr.mxu0 0.0
    %772 = vmatpush1.msra.mxu0 0.0
    %773 = vmatprep.subr.mxu0 0.0
    %774 = vmatpush1.msra.mxu0 0.0
    %775 = vmatprep.subr.mxu0 0.0
    %776 = vmatpush1.msra.mxu0 0.0
    %777 = vmatprep.subr.mxu0 0.0
    %778 = vmatpush1.msra.mxu0 0.0
    %779 = vmatprep.subr.mxu0 0.0
    %780 = vmatpush1.msra.mxu0 0.0
    %781 = vmatprep.subr.mxu0 0.0
    %782 = vmatpush1.msra.mxu0 0.0
    %783 = vmatprep.subr.mxu0 0.0
    %784 = vmatpush1.msra.mxu0 0.0
    %785 = vmatprep.subr.mxu0 0.0
    %786 = vmatpush1.msra.mxu0 0.0
    %787 = vmatprep.subr.mxu0 0.0
    %788 = vmatpush1.msra.mxu0 0.0
    %789 = vmatprep.subr.mxu0 0.0
    %790 = vmatpush1.msra.mxu0 0.0
    %791 = vmatprep.subr.mxu0 0.0
    %792 = vmatpush1.msra.mxu0 0.0
    %793 = vmatprep.subr.mxu0 0.0
    %794 = vmatpush1.msra.mxu0 0.0
    %795 = vmatprep.subr.mxu0 0.0
    %796 = vmatpush1.msra.mxu0 0.0
    %797 = vmatprep.mubr.f32.mxu0 0.0
    %798 = vmatmul.mubr.f32.gmra.mrb[0].mxu0 %v621
    %v799 = vpop.f32.mrb[0].mxu0
    %v800 = vadd.f32 %v656, %v799
    %v801 = vpop.f32.mrb[0].mxu0
    %802 = vmatprep.mubr.f32.mxu0 0.0
    %803 = vmatmul.mubr.f32.gmra.mrb[0].mxu0 %v622
    %v804 = vpop.f32.mrb[0].mxu0
    %v805 = vadd.f32 %v661, %v804
    %v806 = vpop.f32.mrb[0].mxu0
    %807 = vmatprep.mubr.f32.mxu0 0.0
    %808 = vmatmul.mubr.f32.gmra.mrb[0].mxu0 %v623
    %v809 = vpop.f32.mrb[0].mxu0
    %v810 = vadd.f32 %v666, %v809
    %v811 = vpop.f32.mrb[0].mxu0
    %812 = vmatprep.mubr.f32.mxu0 0.0
    %813 = vmatmul.mubr.f32.gmra.mrb[0].mxu0 %v624
    %v814 = vpop.f32.mrb[0].mxu0
    %v815 = vadd.f32 %v671, %v814
    %v816 = vpop.f32.mrb[0].mxu0
    %817 = vmatprep.mubr.f32.mxu0 0.0
    %818 = vmatmul.mubr.f32.gmra.mrb[0].mxu0 %v625
    %v819 = vpop.f32.mrb[0].mxu0
    %v820 = vadd.f32 %v676, %v819
    %v821 = vpop.f32.mrb[0].mxu0
    %822 = vmatprep.mubr.f32.mxu0 0.0
    %823 = vmatmul.mubr.f32.gmra.mrb[0].mxu0 %v626
    %v824 = vpop.f32.mrb[0].mxu0
    %v825 = vadd.f32 %v681, %v824
    %v826 = vpop.f32.mrb[0].mxu0
    %827 = vmatprep.mubr.f32.mxu0 0.0
    %828 = vmatmul.mubr.f32.gmra.mrb[0].mxu0 %v627
    %v829 = vpop.f32.mrb[0].mxu0
    %v830 = vadd.f32 %v686, %v829
    %v831 = vpop.f32.mrb[0].mxu0
    %832 = vmatprep.mubr.f32.mxu0 0.0
    %833 = vmatmul.mubr.f32.gmra.mrb[0].mxu0 %v628
    %v834 = vpop.f32.mrb[0].mxu0
    %v835 = vadd.f32 %v691, %v834
    %v836 = vpop.f32.mrb[0].mxu0
    %837 = vmatprep.mubr.f32.mxu0 0.0
    %838 = vmatmul.mubr.f32.gmra.mrb[0].mxu0 %v629
    %v839 = vpop.f32.mrb[0].mxu0
    %v840 = vadd.f32 %v696, %v839
    %v841 = vpop.f32.mrb[0].mxu0
    %842 = vmatprep.mubr.f32.mxu0 0.0
    %843 = vmatmul.mubr.f32.gmra.mrb[0].mxu0 %v630
    %v844 = vpop.f32.mrb[0].mxu0
    %v845 = vadd.f32 %v701, %v844
    %v846 = vpop.f32.mrb[0].mxu0
    %847 = vmatprep.mubr.f32.mxu0 0.0
    %848 = vmatmul.mubr.f32.gmra.mrb[0].mxu0 %v631
    %v849 = vpop.f32.mrb[0].mxu0
    %v850 = vadd.f32 %v706, %v849
    %v851 = vpop.f32.mrb[0].mxu0
    %852 = vmatprep.mubr.f32.mxu0 0.0
    %853 = vmatmul.mubr.f32.gmra.mrb[0].mxu0 %v632
    %v854 = vpop.f32.mrb[0].mxu0
    %v855 = vadd.f32 %v711, %v854
    %v856 = vpop.f32.mrb[0].mxu0
    %857 = vmatprep.mubr.f32.mxu0 0.0
    %858 = vmatmul.mubr.f32.gmra.mrb[0].mxu0 %v633
    %v859 = vpop.f32.mrb[0].mxu0
    %v860 = vadd.f32 %v716, %v859
    %v861 = vpop.f32.mrb[0].mxu0
    %862 = vmatprep.mubr.f32.mxu0 0.0
    %863 = vmatmul.mubr.f32.gmra.mrb[0].mxu0 %v634
    %v864 = vpop.f32.mrb[0].mxu0
    %v865 = vadd.f32 %v721, %v864
    %v866 = vpop.f32.mrb[0].mxu0
    %867 = vmatprep.mubr.f32.mxu0 0.0
    %868 = vmatmul.mubr.f32.gmra.mrb[0].mxu0 %v635
    %v869 = vpop.f32.mrb[0].mxu0
    %v870 = vadd.f32 %v726, %v869
    %v871 = vpop.f32.mrb[0].mxu0
    %872 = vmatprep.mubr.f32.mxu0 0.0
    %873 = vmatmul.mubr.f32.gmra.mrb[0].mxu0 %v636
    %v874 = vpop.f32.mrb[0].mxu0
    %v875 = vadd.f32 %v731, %v874
    %v876 = vpop.f32.mrb[0].mxu0
    %877 = vdwg.mxu0
    %v878 = vmul.f32 %v800, 0.5
    %v879 = vmul.f32 %v805, 0.5
    %v880 = vmul.f32 %v810, 0.5
    %v881 = vmul.f32 %v815, 0.5
    %v882 = vmul.f32 %v820, 0.5
    %v883 = vmul.f32 %v825, 0.5
    %v884 = vmul.f32 %v830, 0.5
    %v885 = vmul.f32 %v835, 0.5
    %v886 = vmul.f32 %v840, 0.5
    %v887 = vmul.f32 %v845, 0.5
    %v888 = vmul.f32 %v850, 0.5
    %v889 = vmul.f32 %v855, 0.5
    %v890 = vmul.f32 %v860, 0.5
    %v891 = vmul.f32 %v865, 0.5
    %v892 = vmul.f32 %v870, 0.5
    %v893 = vmul.f32 %v875, 0.5
    %v894 = vtanh.pop %v878
    %v895 = vtanh.pop %v879
    %v896 = vtanh.pop %v880
    %v897 = vtanh.pop %v881
    %v898 = vtanh.pop %v882
    %v899 = vtanh.pop %v883
    %v900 = vtanh.pop %v884
    %v901 = vtanh.pop %v885
    %v902 = vtanh.pop %v886
    %v903 = vtanh.pop %v887
    %v904 = vtanh.pop %v888
    %v905 = vtanh.pop %v889
    %v906 = vtanh.pop %v890
    %v907 = vtanh.pop %v891
    %v908 = vtanh.pop %v892
    %v909 = vtanh.pop %v893
    %v910 = vadd.f32 %v894, 1.0
    %v911 = vadd.f32 %v895, 1.0
    %v912 = vadd.f32 %v896, 1.0
    %v913 = vadd.f32 %v897, 1.0
    %v914 = vadd.f32 %v898, 1.0
    %v915 = vadd.f32 %v899, 1.0
    %v916 = vadd.f32 %v900, 1.0
    %v917 = vadd.f32 %v901, 1.0
    %v918 = vadd.f32 %v902, 1.0
    %v919 = vadd.f32 %v903, 1.0
    %v920 = vadd.f32 %v904, 1.0
    %v921 = vadd.f32 %v905, 1.0
    %v922 = vadd.f32 %v906, 1.0
    %v923 = vadd.f32 %v907, 1.0
    %v924 = vadd.f32 %v908, 1.0
    %v925 = vadd.f32 %v909, 1.0
    %v926 = vmul.f32 %v878, %v910
    %v927 = vmul.f32 %v879, %v911
    %v928 = vmul.f32 %v880, %v912
    %v929 = vmul.f32 %v881, %v913
    %v930 = vmul.f32 %v882, %v914
    %v931 = vmul.f32 %v883, %v915
    %v932 = vmul.f32 %v884, %v916
    %v933 = vmul.f32 %v885, %v917
    %v934 = vmul.f32 %v886, %v918
    %v935 = vmul.f32 %v887, %v919
    %v936 = vmul.f32 %v888, %v920
    %v937 = vmul.f32 %v889, %v921
    %v938 = vmul.f32 %v890, %v922
    %v939 = vmul.f32 %v891, %v923
    %v940 = vmul.f32 %v892, %v924
    %v941 = vmul.f32 %v893, %v925
    %v942 = vld [vmem:[%s5] sm:$0x1]
    %s943 = sld [smem:[#allocation2]]
    %v944 = vstv %s943
    %945 = vmatprep.subr.mxu0 0.0
    %946 = vmatpush1.msra.mxu0 %v926
    %947 = vmatprep.subr.mxu0 0.0
    %948 = vmatpush1.msra.mxu0 %v927
    %949 = vmatprep.subr.mxu0 0.0
    %950 = vmatpush1.msra.mxu0 %v928
    %951 = vmatprep.subr.mxu0 0.0
    %952 = vmatpush1.msra.mxu0 %v929
    %953 = vmatprep.subr.mxu0 0.0
    %954 = vmatpush1.msra.mxu0 %v930
    %955 = vmatprep.subr.mxu0 0.0
    %956 = vmatpush1.msra.mxu0 %v931
    %957 = vmatprep.subr.mxu0 0.0
    %958 = vmatpush1.msra.mxu0 %v932
    %959 = vmatprep.subr.mxu0 0.0
    %960 = vmatpush1.msra.mxu0 %v933
    %961 = vmatprep.subr.mxu0 0.0
    %962 = vmatpush1.msra.mxu0 %v934
    %963 = vmatprep.subr.mxu0 0.0
    %964 = vmatpush1.msra.mxu0 %v935
    %965 = vmatprep.subr.mxu0 0.0
    %966 = vmatpush1.msra.mxu0 %v936
    %967 = vmatprep.subr.mxu0 0.0
    %968 = vmatpush1.msra.mxu0 %v937
    %969 = vmatprep.subr.mxu0 0.0
    %970 = vmatpush1.msra.mxu0 %v938
    %971 = vmatprep.subr.mxu0 0.0
    %972 = vmatpush1.msra.mxu0 %v939
    %973 = vmatprep.subr.mxu0 0.0
    %974 = vmatpush1.msra.mxu0 %v940
    %975 = vmatprep.subr.mxu0 0.0
    %976 = vmatpush1.msra.mxu0 %v941
    %977 = vmatprep.subr.mxu0 0.0
    %978 = vmatpush1.msra.mxu0 0.0
    %979 = vmatprep.subr.mxu0 0.0
    %980 = vmatpush1.msra.mxu0 0.0
    %981 = vmatprep.subr.mxu0 0.0
    %982 = vmatpush1.msra.mxu0 0.0
    %983 = vmatprep.subr.mxu0 0.0
    %984 = vmatpush1.msra.mxu0 0.0
    %985 = vmatprep.subr.mxu0 0.0
    %986 = vmatpush1.msra.mxu0 0.0
    %987 = vmatprep.subr.mxu0 0.0
    %988 = vmatpush1.msra.mxu0 0.0
    %989 = vmatprep.subr.mxu0 0.0
    %990 = vmatpush1.msra.mxu0 0.0
    %991 = vmatprep.subr.mxu0 0.0
    %992 = vmatpush1.msra.mxu0 0.0
    %993 = vmatprep.subr.mxu0 0.0
    %994 = vmatpush1.msra.mxu0 0.0
    %995 = vmatprep.subr.mxu0 0.0
    %996 = vmatpush1.msra.mxu0 0.0
    %997 = vmatprep.subr.mxu0 0.0
    %998 = vmatpush1.msra.mxu0 0.0
    %999 = vmatprep.subr.mxu0 0.0
    %1000 = vmatpush1.msra.mxu0 0.0
    %1001 = vmatprep.subr.mxu0 0.0
    %1002 = vmatpush1.msra.mxu0 0.0
    %1003 = vmatprep.subr.mxu0 0.0
    %1004 = vmatpush1.msra.mxu0 0.0
    %1005 = vmatprep.subr.mxu0 0.0
    %1006 = vmatpush1.msra.mxu0 0.0
    %1007 = vmatprep.subr.mxu0 0.0
    %1008 = vmatpush1.msra.mxu0 0.0
    %1009 = vmatprep.mubr.f32.mxu0 0.0
    %1010 = vmatmul.mubr.f32.gmra.mrb[0].mxu0 %v942
    %v1011 = vpop.f32.mrb[0].mxu0
    %v1012 = vadd.f32 %v944, %v1011
    %v1013 = vpop.f32.mrb[0].mxu0
    %1014 = vdwg.mxu0
    %vm1015 = vcmask 57344
    %1016 = vst.msk [vmem:[#allocation3] sm:$0x1] %vm1015, %v1012
    // Predicated region
    $region30: #{tpu_custom_call.1} parent=1 // pred_check
      _
    $region31: #{tpu_custom_call.1} parent=1 // pred_check_branch
      %1018 = sbr.rel (0) target = $region33
    $region32: #{tpu_custom_call.1} parent=1 // pred_region
      %s1020 = ssub.s32 16, 16
      %1021 = vsyncadd [#allocation4], %s1020
      %s1023 = sshll.u32 [#allocation3], 4
      %s1024 = int_to_ptr.vmem [resolvable:$true] %s1023
      %1026 = dma.vmem_to_hbm [thread:$0]  %s1024, 16, %s7, [#allocation4]
    $region33: #{tpu_custom_call.1} parent=1 // pred_fallthru
      _
    // Predicated region
    $region34: #{tpu_custom_call.1} parent=1 // pred_check
      _
    $region35: #{tpu_custom_call.1} parent=1 // pred_check_branch
      %1028 = sbr.rel (0) target = $region37
    $region36: #{tpu_custom_call.1} parent=1 // pred_region
      %1029 = dma.done [#allocation4], 16
    $region37: #{tpu_custom_call.1} parent=1 // pred_fallthru
      _
    %1030 = vsyncpa [#allocation4], 1

</llo_original>
